<compile_context>
chip_gen: v5e
topology: v5e:2x2
jax: 0.10.0
libtpu: 0.0.40
codegen_flags: <defaults>
</compile_context>

<pallas_src>
import jax
import jax.numpy as jnp
from jax.experimental import pallas as pl
from jax.experimental.pallas import tpu as pltpu


HIDDEN = (200, 100, 100, 50, 20, 1)  # fc1, fc3, fc4, fc5, fc6, fc7 output dims

LANE = 128
SUBLANE = 8


def _round_up(n, m):
    return ((n + m - 1) // m) * m


def _chip_defaults():
    """Per-TPU-generation tuning: (epilogue_dtype, max_batch_tile).

    v6e/v7x have a native bf16 VPU path and >=32 MiB scoped VMEM -> bf16
    bias+ReLU epilogue and 4096-row tiles.  v5e and older: f32 epilogue and a
    2048-row tile cap (16 MiB default scoped VMEM, closest to MXU-bound).
    Falls back to the conservative setting if the device kind is unknown
    (either setting is numerically valid everywhere).
    """
    try:
        kind = jax.devices()[0].device_kind.lower()
    except Exception:
        kind = ""
    if any(tag in kind for tag in ("v6", "v7", "7x")):
        return jnp.bfloat16, 4096
    return jnp.float32, 2048


def _ff_kernel(x_ref,
               w1, b1, w3, b3, w4, b4, w5, b5, w6, b6, w7, b7,
               o_ref):
    """Fused 6-layer MLP on one batch tile.

    bf16 MXU dots with f32 accumulation; bias-add + ReLU epilogue in the bias
    dtype (f32 on v5e, bf16 on v6e/v7x).  Dropout is the eval-mode identity.
    """
    h = x_ref[...].astype(jnp.bfloat16)            # f32 -> bf16 cast in-kernel
    layers = ((w1, b1), (w3, b3), (w4, b4), (w5, b5), (w6, b6), (w7, b7))
    act = None
    for li, (w_ref, b_ref) in enumerate(layers):
        acc = jnp.dot(h, w_ref[...], preferred_element_type=jnp.float32)
        act = jnp.maximum(acc.astype(b_ref.dtype) + b_ref[...], 0)
        # dropout: identity in eval mode
        if li + 1 < len(layers):
            h = act.astype(jnp.bfloat16)           # no-op when epilogue is bf16
    # Write back only the true output column(s): lane dim == full array dim,
    # so the narrow block is legal; HBM writeback is 4 B/row instead of a
    # 512 B/row padded slab.
    o_ref[...] = act[:, : o_ref.shape[1]].astype(o_ref.dtype)


def prepare_params(params, *, epilogue_dtype=jnp.float32):
    """Pad/cast parameters for the kernel.

    * W_i -> bf16 with the output dim zero-padded to a 128-lane multiple.  The
      input dim of the FIRST layer stays at input_size (matches the unpadded x
      block); later input dims are padded to match the previous layer's padded
      output.  Zero padding is exact: padded output columns give
      ReLU(0 + 0) = 0, which then meets zero-padded weight rows.
    * b_i -> (1, dout_pad) in `epilogue_dtype` (f32 on v5e, bf16 on v6e/v7x).
    """
    prepared = []
    for li, (w, b) in enumerate(params):
        din, dout = w.shape
        din_p = din if li == 0 else _round_up(din, LANE)
        dout_p = _round_up(dout, LANE)
        w_p = jnp.zeros((din_p, dout_p), jnp.float32).at[:din, :dout].set(w)
        b_p = jnp.zeros((1, dout_p), jnp.float32).at[0, :dout].set(
            jnp.reshape(b, (-1,)))
        prepared.append((w_p.astype(jnp.bfloat16), b_p.astype(epilogue_dtype)))
    return prepared


def feedforward_pallas(x, prepared_params, *, out_dim=1, batch_tile=None):
    """x: (B, input_size) f32.  prepared_params: output of prepare_params().

    Returns (B, out_dim) f32.  x is consumed directly (no wrapper pad/cast
    copy); ragged batch tails are handled by Pallas edge-block masking, which
    is exact because rows are independent and out-of-bounds output rows are
    dropped on store.
    """
    B, D = x.shape
    assert prepared_params[0][0].shape[0] == D, "first-layer K must match input width"

    if batch_tile is None:
        _, max_tile = _chip_defaults()
        if B <= 2 * max_tile:
            # Aim for >= 2 grid steps so v7x's two TensorCores both get work
            # under dimension_semantics=("parallel",).
            batch_tile = min(pl.cdiv(B, 2), max_tile)
        else:
            batch_tile = max_tile
    batch_tile = max(SUBLANE, _round_up(batch_tile, SUBLANE))

    grid_len = pl.cdiv(B, batch_tile)

    flat_args = []
    # x: lane dim == full input width (satisfies the (8,128) rule without
    # padding); the bf16 cast happens inside the kernel.
    in_specs = [pl.BlockSpec((batch_tile, D), lambda i: (i, 0))]
    for w, b in prepared_params:
        flat_args.append(w)
        flat_args.append(b)
        # Full-array blocks with a constant index_map: each weight/bias is
        # DMA'd once and stays resident across the whole batch grid (the same
        # block index is revisited every step -> no re-fetch).
        in_specs.append(pl.BlockSpec(w.shape, lambda i: (0, 0)))
        in_specs.append(pl.BlockSpec(b.shape, lambda i: (0, 0)))

    out = pl.pallas_call(
        _ff_kernel,
        out_shape=jax.ShapeDtypeStruct((B, out_dim), jnp.float32),
        grid_spec=pltpu.PrefetchScalarGridSpec(
            num_scalar_prefetch=0,
            grid=(grid_len,),
            in_specs=in_specs,
            out_specs=pl.BlockSpec((batch_tile, out_dim), lambda i: (i, 0)),
        ),
        compiler_params=pltpu.CompilerParams(
            dimension_semantics=("parallel",),
            vmem_limit_bytes=32 * 1024 * 1024,
        ),
    )(x, *flat_args)

    return out


def init_params(key, input_size):
    """Deterministic parameter init matching the nn.Linear shapes (W as (in, out))."""
    params = []
    dims = (input_size,) + HIDDEN
    for li in range(len(HIDDEN)):
        key, kw, kb = jax.random.split(key, 3)
        fan_in, fan_out = dims[li], dims[li + 1]
        bound = 1.0 / jnp.sqrt(fan_in)
        w = jax.random.uniform(kw, (fan_in, fan_out), jnp.float32,
                               minval=-bound, maxval=bound)
        b = jax.random.uniform(kb, (fan_out,), jnp.float32,
                               minval=-bound, maxval=bound)
        params.append((w, b))
    return params


def feedforward_ref_matched(x, prepared_params):
    """Pure-JAX reference using the same padded bf16/f32 arithmetic as the kernel."""
    h = x.astype(jnp.bfloat16)
    act = None
    n = len(prepared_params)
    for li, (w, b) in enumerate(prepared_params):
        acc = jnp.dot(h, w, preferred_element_type=jnp.float32)
        act = jnp.maximum(acc.astype(b.dtype) + b, 0)
        if li + 1 < n:
            h = act.astype(jnp.bfloat16)
    return act.astype(jnp.float32)


def feedforward_ref_f32(x, params):
    """Full-precision reference of the forward pass (eval-mode dropout)."""
    h = x
    for (w, b) in params:
        h = jnp.maximum(h @ w + b[None, :], 0.0)
    return h


if __name__ == "__main__":
    key = jax.random.PRNGKey(0)
    batch, input_size = 16, 32

    kx, kp = jax.random.split(key)
    x = jax.random.normal(kx, (batch, input_size), jnp.float32)
    raw_params = init_params(kp, input_size)

    epilogue_dtype, _ = _chip_defaults()
    prepared = prepare_params(raw_params, epilogue_dtype=epilogue_dtype)

    out = feedforward_pallas(x, prepared, out_dim=1)
    out = jax.block_until_ready(out)
    assert out.shape == (batch, 1), out.shape

    # Exact-ish check vs a reference using the same bf16/f32 math.
    ref_matched = feedforward_ref_matched(x, prepared)[:, :1]
    assert jnp.allclose(out, ref_matched, atol=1e-3, rtol=1e-2), \
        "mismatch vs bf16-matched reference"

    # Loose sanity check vs the full f32 reference (bf16 rounding error only).
    ref_f32 = feedforward_ref_f32(x, raw_params)
    assert jnp.allclose(out, ref_f32, atol=1e-1, rtol=1e-1), \
        "mismatch vs f32 reference"

    print("KERNEL_OK")
</pallas_src>

<mosaic_0001>
module attributes {stable_mosaic.version = 11 : i64} {
  func.func @_ff_kernel(%arg0: i32, %arg1: memref<8x32xf32, #tpu.memory_space<vmem>>, %arg2: memref<32x256xbf16, #tpu.memory_space<vmem>>, %arg3: memref<1x256xf32, #tpu.memory_space<vmem>>, %arg4: memref<256x128xbf16, #tpu.memory_space<vmem>>, %arg5: memref<1x128xf32, #tpu.memory_space<vmem>>, %arg6: memref<128x128xbf16, #tpu.memory_space<vmem>>, %arg7: memref<1x128xf32, #tpu.memory_space<vmem>>, %arg8: memref<128x128xbf16, #tpu.memory_space<vmem>>, %arg9: memref<1x128xf32, #tpu.memory_space<vmem>>, %arg10: memref<128x128xbf16, #tpu.memory_space<vmem>>, %arg11: memref<1x128xf32, #tpu.memory_space<vmem>>, %arg12: memref<128x128xbf16, #tpu.memory_space<vmem>>, %arg13: memref<1x128xf32, #tpu.memory_space<vmem>>, %arg14: memref<8x1xf32, #tpu.memory_space<vmem>>) attributes {dimension_semantics = [#tpu.dimension_semantics<parallel>], iteration_bounds = array<i64: 2>, scalar_prefetch = 0 : i64, scratch_operands = 0 : i64, tpu.core_type = #tpu.core_type<tc>, window_params = [{transform_indices = @transform_0, window_bounds = array<i64: 8, 32>}, {pipeline_mode = #tpu.pipeline_mode<synchronous>, transform_indices = @transform_1, window_bounds = array<i64: 32, 256>}, {pipeline_mode = #tpu.pipeline_mode<synchronous>, transform_indices = @transform_2, window_bounds = array<i64: 1, 256>}, {pipeline_mode = #tpu.pipeline_mode<synchronous>, transform_indices = @transform_3, window_bounds = array<i64: 256, 128>}, {pipeline_mode = #tpu.pipeline_mode<synchronous>, transform_indices = @transform_4, window_bounds = array<i64: 1, 128>}, {pipeline_mode = #tpu.pipeline_mode<synchronous>, transform_indices = @transform_5, window_bounds = array<i64: 128, 128>}, {pipeline_mode = #tpu.pipeline_mode<synchronous>, transform_indices = @transform_6, window_bounds = array<i64: 1, 128>}, {pipeline_mode = #tpu.pipeline_mode<synchronous>, transform_indices = @transform_7, window_bounds = array<i64: 128, 128>}, {pipeline_mode = #tpu.pipeline_mode<synchronous>, transform_indices = @transform_8, window_bounds = array<i64: 1, 128>}, {pipeline_mode = #tpu.pipeline_mode<synchronous>, transform_indices = @transform_9, window_bounds = array<i64: 128, 128>}, {pipeline_mode = #tpu.pipeline_mode<synchronous>, transform_indices = @transform_10, window_bounds = array<i64: 1, 128>}, {pipeline_mode = #tpu.pipeline_mode<synchronous>, transform_indices = @transform_11, window_bounds = array<i64: 128, 128>}, {pipeline_mode = #tpu.pipeline_mode<synchronous>, transform_indices = @transform_12, window_bounds = array<i64: 1, 128>}, {transform_indices = @transform_13, window_bounds = array<i64: 8, 1>}]} {
    %c0 = arith.constant 0 : index
    %c0_0 = arith.constant 0 : index
    %0 = vector.load %arg1[%c0, %c0_0] : memref<8x32xf32, #tpu.memory_space<vmem>>, vector<8x32xf32>
    %1 = arith.truncf %0 : vector<8x32xf32> to vector<8x32xbf16>
    %c0_1 = arith.constant 0 : index
    %c0_2 = arith.constant 0 : index
    %2 = vector.load %arg2[%c0_1, %c0_2] : memref<32x256xbf16, #tpu.memory_space<vmem>>, vector<32x256xbf16>
    %cst = arith.constant dense<0.000000e+00> : vector<8x256xf32>
    %3 = tpu.matmul %1, %2, %cst {dimension_numbers = #tpu.dot_dimension_numbers<[1], [0], [0], [1], [0, 0, 1, 1], [], []>} : vector<8x32xbf16>, vector<32x256xbf16>, vector<8x256xf32> -> vector<8x256xf32>
    %c0_3 = arith.constant 0 : index
    %c0_4 = arith.constant 0 : index
    %4 = vector.load %arg3[%c0_3, %c0_4] : memref<1x256xf32, #tpu.memory_space<vmem>>, vector<1x256xf32>
    %5 = vector.broadcast %4 : vector<1x256xf32> to vector<8x256xf32>
    %6 = arith.addf %3, %5 : vector<8x256xf32>
    %cst_5 = arith.constant 0.000000e+00 : f32
    %7 = vector.broadcast %cst_5 : f32 to vector<8x256xf32>
    %8 = arith.maximumf %6, %7 : vector<8x256xf32>
    %9 = arith.truncf %8 : vector<8x256xf32> to vector<8x256xbf16>
    %c0_6 = arith.constant 0 : index
    %c0_7 = arith.constant 0 : index
    %10 = vector.load %arg4[%c0_6, %c0_7] : memref<256x128xbf16, #tpu.memory_space<vmem>>, vector<256x128xbf16>
    %cst_8 = arith.constant dense<0.000000e+00> : vector<8x128xf32>
    %11 = tpu.matmul %9, %10, %cst_8 {dimension_numbers = #tpu.dot_dimension_numbers<[1], [0], [0], [1], [0, 0, 1, 1], [], []>} : vector<8x256xbf16>, vector<256x128xbf16>, vector<8x128xf32> -> vector<8x128xf32>
    %c0_9 = arith.constant 0 : index
    %c0_10 = arith.constant 0 : index
    %12 = vector.load %arg5[%c0_9, %c0_10] : memref<1x128xf32, #tpu.memory_space<vmem>>, vector<1x128xf32>
    %13 = vector.broadcast %12 : vector<1x128xf32> to vector<8x128xf32>
    %14 = arith.addf %11, %13 : vector<8x128xf32>
    %cst_11 = arith.constant 0.000000e+00 : f32
    %15 = vector.broadcast %cst_11 : f32 to vector<8x128xf32>
    %16 = arith.maximumf %14, %15 : vector<8x128xf32>
    %17 = arith.truncf %16 : vector<8x128xf32> to vector<8x128xbf16>
    %c0_12 = arith.constant 0 : index
    %c0_13 = arith.constant 0 : index
    %18 = vector.load %arg6[%c0_12, %c0_13] : memref<128x128xbf16, #tpu.memory_space<vmem>>, vector<128x128xbf16>
    %cst_14 = arith.constant dense<0.000000e+00> : vector<8x128xf32>
    %19 = tpu.matmul %17, %18, %cst_14 {dimension_numbers = #tpu.dot_dimension_numbers<[1], [0], [0], [1], [0, 0, 1, 1], [], []>} : vector<8x128xbf16>, vector<128x128xbf16>, vector<8x128xf32> -> vector<8x128xf32>
    %c0_15 = arith.constant 0 : index
    %c0_16 = arith.constant 0 : index
    %20 = vector.load %arg7[%c0_15, %c0_16] : memref<1x128xf32, #tpu.memory_space<vmem>>, vector<1x128xf32>
    %21 = vector.broadcast %20 : vector<1x128xf32> to vector<8x128xf32>
    %22 = arith.addf %19, %21 : vector<8x128xf32>
    %cst_17 = arith.constant 0.000000e+00 : f32
    %23 = vector.broadcast %cst_17 : f32 to vector<8x128xf32>
    %24 = arith.maximumf %22, %23 : vector<8x128xf32>
    %25 = arith.truncf %24 : vector<8x128xf32> to vector<8x128xbf16>
    %c0_18 = arith.constant 0 : index
    %c0_19 = arith.constant 0 : index
    %26 = vector.load %arg8[%c0_18, %c0_19] : memref<128x128xbf16, #tpu.memory_space<vmem>>, vector<128x128xbf16>
    %cst_20 = arith.constant dense<0.000000e+00> : vector<8x128xf32>
    %27 = tpu.matmul %25, %26, %cst_20 {dimension_numbers = #tpu.dot_dimension_numbers<[1], [0], [0], [1], [0, 0, 1, 1], [], []>} : vector<8x128xbf16>, vector<128x128xbf16>, vector<8x128xf32> -> vector<8x128xf32>
    %c0_21 = arith.constant 0 : index
    %c0_22 = arith.constant 0 : index
    %28 = vector.load %arg9[%c0_21, %c0_22] : memref<1x128xf32, #tpu.memory_space<vmem>>, vector<1x128xf32>
    %29 = vector.broadcast %28 : vector<1x128xf32> to vector<8x128xf32>
    %30 = arith.addf %27, %29 : vector<8x128xf32>
    %cst_23 = arith.constant 0.000000e+00 : f32
    %31 = vector.broadcast %cst_23 : f32 to vector<8x128xf32>
    %32 = arith.maximumf %30, %31 : vector<8x128xf32>
    %33 = arith.truncf %32 : vector<8x128xf32> to vector<8x128xbf16>
    %c0_24 = arith.constant 0 : index
    %c0_25 = arith.constant 0 : index
    %34 = vector.load %arg10[%c0_24, %c0_25] : memref<128x128xbf16, #tpu.memory_space<vmem>>, vector<128x128xbf16>
    %cst_26 = arith.constant dense<0.000000e+00> : vector<8x128xf32>
    %35 = tpu.matmul %33, %34, %cst_26 {dimension_numbers = #tpu.dot_dimension_numbers<[1], [0], [0], [1], [0, 0, 1, 1], [], []>} : vector<8x128xbf16>, vector<128x128xbf16>, vector<8x128xf32> -> vector<8x128xf32>
    %c0_27 = arith.constant 0 : index
    %c0_28 = arith.constant 0 : index
    %36 = vector.load %arg11[%c0_27, %c0_28] : memref<1x128xf32, #tpu.memory_space<vmem>>, vector<1x128xf32>
    %37 = vector.broadcast %36 : vector<1x128xf32> to vector<8x128xf32>
    %38 = arith.addf %35, %37 : vector<8x128xf32>
    %cst_29 = arith.constant 0.000000e+00 : f32
    %39 = vector.broadcast %cst_29 : f32 to vector<8x128xf32>
    %40 = arith.maximumf %38, %39 : vector<8x128xf32>
    %41 = arith.truncf %40 : vector<8x128xf32> to vector<8x128xbf16>
    %c0_30 = arith.constant 0 : index
    %c0_31 = arith.constant 0 : index
    %42 = vector.load %arg12[%c0_30, %c0_31] : memref<128x128xbf16, #tpu.memory_space<vmem>>, vector<128x128xbf16>
    %cst_32 = arith.constant dense<0.000000e+00> : vector<8x128xf32>
    %43 = tpu.matmul %41, %42, %cst_32 {dimension_numbers = #tpu.dot_dimension_numbers<[1], [0], [0], [1], [0, 0, 1, 1], [], []>} : vector<8x128xbf16>, vector<128x128xbf16>, vector<8x128xf32> -> vector<8x128xf32>
    %c0_33 = arith.constant 0 : index
    %c0_34 = arith.constant 0 : index
    %44 = vector.load %arg13[%c0_33, %c0_34] : memref<1x128xf32, #tpu.memory_space<vmem>>, vector<1x128xf32>
    %45 = vector.broadcast %44 : vector<1x128xf32> to vector<8x128xf32>
    %46 = arith.addf %43, %45 : vector<8x128xf32>
    %cst_35 = arith.constant 0.000000e+00 : f32
    %47 = vector.broadcast %cst_35 : f32 to vector<8x128xf32>
    %48 = arith.maximumf %46, %47 : vector<8x128xf32>
    %49 = vector.extract_strided_slice %48 {offsets = [0, 0], sizes = [8, 1], strides = [1, 1]} : vector<8x128xf32> to vector<8x1xf32>
    %c0_36 = arith.constant 0 : index
    %c0_37 = arith.constant 0 : index
    %50 = vector.load %arg14[%c0_36, %c0_37] : memref<8x1xf32, #tpu.memory_space<vmem>>, vector<8x1xf32>
    tpu.vector_store %arg14[%c0_36, %c0_37], %49 {strides = array<i32>} : memref<8x1xf32, #tpu.memory_space<vmem>>, vector<8x1xf32>,
    return
  }
  func.func @transform_0(%arg0: i32) -> (i32, i32) {
    %c0_i32 = arith.constant 0 : i32
    %c0_i32_0 = arith.constant 0 : i32
    return %arg0, %c0_i32 : i32, i32
  }
  func.func @transform_1(%arg0: i32) -> (i32, i32) {
    %c0_i32 = arith.constant 0 : i32
    %c0_i32_0 = arith.constant 0 : i32
    %c0_i32_1 = arith.constant 0 : i32
    return %c0_i32, %c0_i32_0 : i32, i32
  }
  func.func @transform_2(%arg0: i32) -> (i32, i32) {
    %c0_i32 = arith.constant 0 : i32
    %c0_i32_0 = arith.constant 0 : i32
    %c0_i32_1 = arith.constant 0 : i32
    return %c0_i32, %c0_i32_0 : i32, i32
  }
  func.func @transform_3(%arg0: i32) -> (i32, i32) {
    %c0_i32 = arith.constant 0 : i32
    %c0_i32_0 = arith.constant 0 : i32
    %c0_i32_1 = arith.constant 0 : i32
    return %c0_i32, %c0_i32_0 : i32, i32
  }
  func.func @transform_4(%arg0: i32) -> (i32, i32) {
    %c0_i32 = arith.constant 0 : i32
    %c0_i32_0 = arith.constant 0 : i32
    %c0_i32_1 = arith.constant 0 : i32
    return %c0_i32, %c0_i32_0 : i32, i32
  }
  func.func @transform_5(%arg0: i32) -> (i32, i32) {
    %c0_i32 = arith.constant 0 : i32
    %c0_i32_0 = arith.constant 0 : i32
    %c0_i32_1 = arith.constant 0 : i32
    return %c0_i32, %c0_i32_0 : i32, i32
  }
  func.func @transform_6(%arg0: i32) -> (i32, i32) {
    %c0_i32 = arith.constant 0 : i32
    %c0_i32_0 = arith.constant 0 : i32
    %c0_i32_1 = arith.constant 0 : i32
    return %c0_i32, %c0_i32_0 : i32, i32
  }
  func.func @transform_7(%arg0: i32) -> (i32, i32) {
    %c0_i32 = arith.constant 0 : i32
    %c0_i32_0 = arith.constant 0 : i32
    %c0_i32_1 = arith.constant 0 : i32
    return %c0_i32, %c0_i32_0 : i32, i32
  }
  func.func @transform_8(%arg0: i32) -> (i32, i32) {
    %c0_i32 = arith.constant 0 : i32
    %c0_i32_0 = arith.constant 0 : i32
    %c0_i32_1 = arith.constant 0 : i32
    return %c0_i32, %c0_i32_0 : i32, i32
  }
  func.func @transform_9(%arg0: i32) -> (i32, i32) {
    %c0_i32 = arith.constant 0 : i32
    %c0_i32_0 = arith.constant 0 : i32
    %c0_i32_1 = arith.constant 0 : i32
    return %c0_i32, %c0_i32_0 : i32, i32
  }
  func.func @transform_10(%arg0: i32) -> (i32, i32) {
    %c0_i32 = arith.constant 0 : i32
    %c0_i32_0 = arith.constant 0 : i32
    %c0_i32_1 = arith.constant 0 : i32
    return %c0_i32, %c0_i32_0 : i32, i32
  }
  func.func @transform_11(%arg0: i32) -> (i32, i32) {
    %c0_i32 = arith.constant 0 : i32
    %c0_i32_0 = arith.constant 0 : i32
    %c0_i32_1 = arith.constant 0 : i32
    return %c0_i32, %c0_i32_0 : i32, i32
  }
  func.func @transform_12(%arg0: i32) -> (i32, i32) {
    %c0_i32 = arith.constant 0 : i32
    %c0_i32_0 = arith.constant 0 : i32
    %c0_i32_1 = arith.constant 0 : i32
    return %c0_i32, %c0_i32_0 : i32, i32
  }
  func.func @transform_13(%arg0: i32) -> (i32, i32) {
    %c0_i32 = arith.constant 0 : i32
    %c0_i32_0 = arith.constant 0 : i32
    return %arg0, %c0_i32 : i32, i32
  }
}

</mosaic_0001>

<llo_original>
// kernel: tpu_custom_call.1
$region0: #{tpu_custom_call.1}
  #allocation0 [shape = 'u32[]', space=smem, size = 0x4, offset = 0x4, fixed_abs, tag = 'smem constant byte address 0x4 - core index']
  #allocation1 [shape = 'u32[72,128]{1,0:T(1,128)}', space=vmem, size = 0x9000, scoped, tag = 'internal scratch']
  %s0 = inlined_call_operand.hbm [shape: f32[16,32], index: 0, kind: input, shape index: {}]
  %s1 = inlined_call_operand.hbm [shape: bf16[32,256], index: 1, kind: input, shape index: {}]
  %s2 = inlined_call_operand.hbm [shape: f32[1,256], index: 2, kind: input, shape index: {}]
  %s3 = inlined_call_operand.hbm [shape: bf16[256,128], index: 3, kind: input, shape index: {}]
  %s4 = inlined_call_operand.vmem [shape: f32[1,128], index: 4, kind: input, shape index: {}]
  %s5 = inlined_call_operand.hbm [shape: bf16[128,128], index: 5, kind: input, shape index: {}]
  %s6 = inlined_call_operand.vmem [shape: f32[1,128], index: 6, kind: input, shape index: {}]
  %s7 = inlined_call_operand.hbm [shape: bf16[128,128], index: 7, kind: input, shape index: {}]
  %s8 = inlined_call_operand.vmem [shape: f32[1,128], index: 8, kind: input, shape index: {}]
  %s9 = inlined_call_operand.hbm [shape: bf16[128,128], index: 9, kind: input, shape index: {}]
  %s10 = inlined_call_operand.vmem [shape: f32[1,128], index: 10, kind: input, shape index: {}]
  %s11 = inlined_call_operand.hbm [shape: bf16[128,128], index: 11, kind: input, shape index: {}]
  %s12 = inlined_call_operand.vmem [shape: f32[1,128], index: 12, kind: input, shape index: {}]
  %s13 = inlined_call_operand.vmem [shape: f32[16,1], index: 13, kind: output, shape index: {}]
  %s14 = sld [smem:[#allocation0]]
  $region117: #{tpu_custom_call.1} parent=0
    _
  %s16 = ssub.s32 1, %s14
  %s17 = scalar_select 0, %s16, %s14
  $region1: #{tpu_custom_call.1} parent=0
    #allocation2 [shape = 'u8[8192]{0}', space=vmem, size = 0x2000, scoped, tag = 'input window, operand 0']
    #allocation3 [shape = 's32[2]{0}', space=sflag, size = 0x8, scoped, tag = 'scoped memory for tpu_custom_call.1']
    #allocation4 [shape = 'u8[16384]{0}', space=vmem, size = 0x4000, scoped, tag = 'input window, operand 1, single buffered']
    #allocation5 [shape = 's32[1]{0}', space=sflag, size = 0x4, scoped, tag = 'scoped memory for tpu_custom_call.1']
    #allocation6 [shape = 'u8[1024]{0}', space=vmem, size = 0x400, scoped, tag = 'input window, operand 2, single buffered']
    #allocation7 [shape = 'u8[65536]{0}', space=vmem, size = 0x10000, scoped, tag = 'input window, operand 3, single buffered']
    #allocation8 [shape = 's32[1]{0}', space=sflag, size = 0x4, scoped, tag = 'scoped memory for tpu_custom_call.1']
    #allocation9 [shape = 'u8[32768]{0}', space=vmem, size = 0x8000, scoped, tag = 'input window, operand 5, single buffered']
    #allocation10 [shape = 'u8[32768]{0}', space=vmem, size = 0x8000, scoped, tag = 'input window, operand 7, single buffered']
    #allocation11 [shape = 's32[1]{0}', space=sflag, size = 0x4, scoped, tag = 'scoped memory for tpu_custom_call.1']
    #allocation12 [shape = 'u8[32768]{0}', space=vmem, size = 0x8000, scoped, tag = 'input window, operand 9, single buffered']
    #allocation13 [shape = 'u8[32768]{0}', space=vmem, size = 0x8000, scoped, tag = 'input window, operand 11, single buffered']
    #allocation14 [shape = 's32[1]{0}', space=sflag, size = 0x4, scoped, tag = 'scoped memory for tpu_custom_call.1']
    %18 = vsyncpa [#allocation3], 0
    %s19 = scalar_lea.sflag [#allocation3], 1
    %20 = vsyncpa %s19, 0
    %21 = vsyncpa [#allocation5], 0
    %22 = vsyncpa [#allocation8], 0
    %23 = vsyncpa [#allocation11], 0
    %24 = vsyncpa [#allocation14], 0
    loop: start=0, step=1, limit=4
    $region2: #{tpu_custom_call.1} parent=1 // loop_pre_header
      _
    $region3: #{tpu_custom_call.1} parent=1 // loop_header
      %s26 = sphi 0, %s30
      %p27 = scmp.ge.s32.totalorder %s26, 4
      %s36 = sphi 0, %s38
      %s39 = sphi 0, %s36
      %s40 = sphi 0, %s39
      %s56 = sphi 0, %s40
      %s60 = sphi 0, %s60
      %s62 = sphi 0, %s60
      %s63 = sphi 0, %s62
      %s77 = sphi 0, %s63
      %s81 = sphi 0, %s81
      %s83 = sphi 0, %s81
      %s84 = sphi 0, %s83
      %s98 = sphi 0, %s84
      %s102 = sphi 0, %s102
      %s104 = sphi 0, %s102
      %s105 = sphi 0, %s104
      %s119 = sphi 0, %s105
      %s123 = sphi 0, %s123
      %s125 = sphi 0, %s123
      %s126 = sphi 0, %s125
      %s140 = sphi 0, %s126
      %s144 = sphi 0, %s144
      %s146 = sphi 0, %s144
      %s147 = sphi 0, %s146
      %s161 = sphi 0, %s147
      %s165 = sphi 0, %s165
      %s167 = sphi 0, %s165
      %s168 = sphi 0, %s167
      %s182 = sphi 0, %s168
      %s186 = sphi 0, %s186
      %s188 = sphi 0, %s186
      %s189 = sphi 0, %s188
      %s203 = sphi 0, %s189
      %s207 = sphi 0, %s207
      %s209 = sphi 0, %s207
      %s210 = sphi 0, %s209
      %s224 = sphi 0, %s210
      %s228 = sphi 0, %s228
      %s230 = sphi 0, %s228
      %s231 = sphi 0, %s230
      %s245 = sphi 0, %s231
      %s249 = sphi 0, %s249
      %s251 = sphi 0, %s249
      %s252 = sphi 0, %s251
      %s266 = sphi 0, %s252
      %s270 = sphi 0, %s270
      %s272 = sphi 0, %s270
      %s273 = sphi 0, %s272
      %s287 = sphi 0, %s273
      %s291 = sphi 0, %s291
      %s293 = sphi 0, %s291
      %s294 = sphi 0, %s293
      %s308 = sphi 0, %s294
      %s314 = sphi 0, %s316
      %s317 = sphi 0, %s314
      %s318 = sphi 0, %s317
      %s334 = sphi 0, %s318
    $region4: #{tpu_custom_call.1} parent=1 // loop_header_branch
      %29 = sbr.rel (%p27) target = $region8
    $region5: #{tpu_custom_call.1} parent=1 // loop_body
      %s31 = ssub.s32 %s26, 1
      %s32 = ssub.s32 %s26, 2
      %s33 = sadd.s32 %s26, 1
      %s34 = ssub.s32 %s26, %s33
      %p35 = scmp.eq.s32.totalorder %s34, 0
      %s37 = sadd.s32 %s36, 1
      %s38 = scalar_select %p35, %s36, %s37
      %p41 = pneg %p35
      %p42 = scmp.eq.s32.totalorder %s26, 1
      %p43 = por %p41, %p42
      %p44 = scmp.ne.s32.totalorder %s36, %s39
      %p45 = scmp.eq.s32.totalorder %s26, 0
      %p46 = por %p44, %p45
      %p47 = scmp.ne.s32.totalorder %s36, %s39
      %p48 = scmp.eq.s32.totalorder %s31, 1
      %p49 = por %p47, %p48
      %p50 = scmp.ne.s32.totalorder %s39, %s40
      %p51 = scmp.eq.s32.totalorder %s31, 0
      %p52 = por %p50, %p51
      %p53 = scmp.ne.s32.totalorder %s39, %s40
      %p54 = scmp.eq.s32.totalorder %s32, 1
      %p55 = por %p53, %p54
      %p57 = scmp.ne.s32.totalorder %s40, %s56
      %p58 = scmp.eq.s32.totalorder %s32, 0
      %p59 = por %p57, %p58
      %s61 = sadd.s32 %s60, 1
      %p64 = scmp.eq.s32.totalorder %s26, 1
      %p65 = scmp.ne.s32.totalorder %s60, %s62
      %p66 = scmp.eq.s32.totalorder %s26, 0
      %p67 = por %p65, %p66
      %p68 = scmp.ne.s32.totalorder %s60, %s62
      %p69 = scmp.eq.s32.totalorder %s31, 1
      %p70 = por %p68, %p69
      %p71 = scmp.ne.s32.totalorder %s62, %s63
      %p72 = scmp.eq.s32.totalorder %s31, 0
      %p73 = por %p71, %p72
      %p74 = scmp.ne.s32.totalorder %s62, %s63
      %p75 = scmp.eq.s32.totalorder %s32, 1
      %p76 = por %p74, %p75
      %p78 = scmp.ne.s32.totalorder %s63, %s77
      %p79 = scmp.eq.s32.totalorder %s32, 0
      %p80 = por %p78, %p79
      %s82 = sadd.s32 %s81, 1
      %p85 = scmp.eq.s32.totalorder %s26, 1
      %p86 = scmp.ne.s32.totalorder %s81, %s83
      %p87 = scmp.eq.s32.totalorder %s26, 0
      %p88 = por %p86, %p87
      %p89 = scmp.ne.s32.totalorder %s81, %s83
      %p90 = scmp.eq.s32.totalorder %s31, 1
      %p91 = por %p89, %p90
      %p92 = scmp.ne.s32.totalorder %s83, %s84
      %p93 = scmp.eq.s32.totalorder %s31, 0
      %p94 = por %p92, %p93
      %p95 = scmp.ne.s32.totalorder %s83, %s84
      %p96 = scmp.eq.s32.totalorder %s32, 1
      %p97 = por %p95, %p96
      %p99 = scmp.ne.s32.totalorder %s84, %s98
      %p100 = scmp.eq.s32.totalorder %s32, 0
      %p101 = por %p99, %p100
      %s103 = sadd.s32 %s102, 1
      %p106 = scmp.eq.s32.totalorder %s26, 1
      %p107 = scmp.ne.s32.totalorder %s102, %s104
      %p108 = scmp.eq.s32.totalorder %s26, 0
      %p109 = por %p107, %p108
      %p110 = scmp.ne.s32.totalorder %s102, %s104
      %p111 = scmp.eq.s32.totalorder %s31, 1
      %p112 = por %p110, %p111
      %p113 = scmp.ne.s32.totalorder %s104, %s105
      %p114 = scmp.eq.s32.totalorder %s31, 0
      %p115 = por %p113, %p114
      %p116 = scmp.ne.s32.totalorder %s104, %s105
      %p117 = scmp.eq.s32.totalorder %s32, 1
      %p118 = por %p116, %p117
      %p120 = scmp.ne.s32.totalorder %s105, %s119
      %p121 = scmp.eq.s32.totalorder %s32, 0
      %p122 = por %p120, %p121
      %s124 = sadd.s32 %s123, 1
      %p127 = scmp.eq.s32.totalorder %s26, 1
      %p128 = scmp.ne.s32.totalorder %s123, %s125
      %p129 = scmp.eq.s32.totalorder %s26, 0
      %p130 = por %p128, %p129
      %p131 = scmp.ne.s32.totalorder %s123, %s125
      %p132 = scmp.eq.s32.totalorder %s31, 1
      %p133 = por %p131, %p132
      %p134 = scmp.ne.s32.totalorder %s125, %s126
      %p135 = scmp.eq.s32.totalorder %s31, 0
      %p136 = por %p134, %p135
      %p137 = scmp.ne.s32.totalorder %s125, %s126
      %p138 = scmp.eq.s32.totalorder %s32, 1
      %p139 = por %p137, %p138
      %p141 = scmp.ne.s32.totalorder %s126, %s140
      %p142 = scmp.eq.s32.totalorder %s32, 0
      %p143 = por %p141, %p142
      %s145 = sadd.s32 %s144, 1
      %p148 = scmp.eq.s32.totalorder %s26, 1
      %p149 = scmp.ne.s32.totalorder %s144, %s146
      %p150 = scmp.eq.s32.totalorder %s26, 0
      %p151 = por %p149, %p150
      %p152 = scmp.ne.s32.totalorder %s144, %s146
      %p153 = scmp.eq.s32.totalorder %s31, 1
      %p154 = por %p152, %p153
      %p155 = scmp.ne.s32.totalorder %s146, %s147
      %p156 = scmp.eq.s32.totalorder %s31, 0
      %p157 = por %p155, %p156
      %p158 = scmp.ne.s32.totalorder %s146, %s147
      %p159 = scmp.eq.s32.totalorder %s32, 1
      %p160 = por %p158, %p159
      %p162 = scmp.ne.s32.totalorder %s147, %s161
      %p163 = scmp.eq.s32.totalorder %s32, 0
      %p164 = por %p162, %p163
      %s166 = sadd.s32 %s165, 1
      %p169 = scmp.eq.s32.totalorder %s26, 1
      %p170 = scmp.ne.s32.totalorder %s165, %s167
      %p171 = scmp.eq.s32.totalorder %s26, 0
      %p172 = por %p170, %p171
      %p173 = scmp.ne.s32.totalorder %s165, %s167
      %p174 = scmp.eq.s32.totalorder %s31, 1
      %p175 = por %p173, %p174
      %p176 = scmp.ne.s32.totalorder %s167, %s168
      %p177 = scmp.eq.s32.totalorder %s31, 0
      %p178 = por %p176, %p177
      %p179 = scmp.ne.s32.totalorder %s167, %s168
      %p180 = scmp.eq.s32.totalorder %s32, 1
      %p181 = por %p179, %p180
      %p183 = scmp.ne.s32.totalorder %s168, %s182
      %p184 = scmp.eq.s32.totalorder %s32, 0
      %p185 = por %p183, %p184
      %s187 = sadd.s32 %s186, 1
      %p190 = scmp.eq.s32.totalorder %s26, 1
      %p191 = scmp.ne.s32.totalorder %s186, %s188
      %p192 = scmp.eq.s32.totalorder %s26, 0
      %p193 = por %p191, %p192
      %p194 = scmp.ne.s32.totalorder %s186, %s188
      %p195 = scmp.eq.s32.totalorder %s31, 1
      %p196 = por %p194, %p195
      %p197 = scmp.ne.s32.totalorder %s188, %s189
      %p198 = scmp.eq.s32.totalorder %s31, 0
      %p199 = por %p197, %p198
      %p200 = scmp.ne.s32.totalorder %s188, %s189
      %p201 = scmp.eq.s32.totalorder %s32, 1
      %p202 = por %p200, %p201
      %p204 = scmp.ne.s32.totalorder %s189, %s203
      %p205 = scmp.eq.s32.totalorder %s32, 0
      %p206 = por %p204, %p205
      %s208 = sadd.s32 %s207, 1
      %p211 = scmp.eq.s32.totalorder %s26, 1
      %p212 = scmp.ne.s32.totalorder %s207, %s209
      %p213 = scmp.eq.s32.totalorder %s26, 0
      %p214 = por %p212, %p213
      %p215 = scmp.ne.s32.totalorder %s207, %s209
      %p216 = scmp.eq.s32.totalorder %s31, 1
      %p217 = por %p215, %p216
      %p218 = scmp.ne.s32.totalorder %s209, %s210
      %p219 = scmp.eq.s32.totalorder %s31, 0
      %p220 = por %p218, %p219
      %p221 = scmp.ne.s32.totalorder %s209, %s210
      %p222 = scmp.eq.s32.totalorder %s32, 1
      %p223 = por %p221, %p222
      %p225 = scmp.ne.s32.totalorder %s210, %s224
      %p226 = scmp.eq.s32.totalorder %s32, 0
      %p227 = por %p225, %p226
      %s229 = sadd.s32 %s228, 1
      %p232 = scmp.eq.s32.totalorder %s26, 1
      %p233 = scmp.ne.s32.totalorder %s228, %s230
      %p234 = scmp.eq.s32.totalorder %s26, 0
      %p235 = por %p233, %p234
      %p236 = scmp.ne.s32.totalorder %s228, %s230
      %p237 = scmp.eq.s32.totalorder %s31, 1
      %p238 = por %p236, %p237
      %p239 = scmp.ne.s32.totalorder %s230, %s231
      %p240 = scmp.eq.s32.totalorder %s31, 0
      %p241 = por %p239, %p240
      %p242 = scmp.ne.s32.totalorder %s230, %s231
      %p243 = scmp.eq.s32.totalorder %s32, 1
      %p244 = por %p242, %p243
      %p246 = scmp.ne.s32.totalorder %s231, %s245
      %p247 = scmp.eq.s32.totalorder %s32, 0
      %p248 = por %p246, %p247
      %s250 = sadd.s32 %s249, 1
      %p253 = scmp.eq.s32.totalorder %s26, 1
      %p254 = scmp.ne.s32.totalorder %s249, %s251
      %p255 = scmp.eq.s32.totalorder %s26, 0
      %p256 = por %p254, %p255
      %p257 = scmp.ne.s32.totalorder %s249, %s251
      %p258 = scmp.eq.s32.totalorder %s31, 1
      %p259 = por %p257, %p258
      %p260 = scmp.ne.s32.totalorder %s251, %s252
      %p261 = scmp.eq.s32.totalorder %s31, 0
      %p262 = por %p260, %p261
      %p263 = scmp.ne.s32.totalorder %s251, %s252
      %p264 = scmp.eq.s32.totalorder %s32, 1
      %p265 = por %p263, %p264
      %p267 = scmp.ne.s32.totalorder %s252, %s266
      %p268 = scmp.eq.s32.totalorder %s32, 0
      %p269 = por %p267, %p268
      %s271 = sadd.s32 %s270, 1
      %p274 = scmp.eq.s32.totalorder %s26, 1
      %p275 = scmp.ne.s32.totalorder %s270, %s272
      %p276 = scmp.eq.s32.totalorder %s26, 0
      %p277 = por %p275, %p276
      %p278 = scmp.ne.s32.totalorder %s270, %s272
      %p279 = scmp.eq.s32.totalorder %s31, 1
      %p280 = por %p278, %p279
      %p281 = scmp.ne.s32.totalorder %s272, %s273
      %p282 = scmp.eq.s32.totalorder %s31, 0
      %p283 = por %p281, %p282
      %p284 = scmp.ne.s32.totalorder %s272, %s273
      %p285 = scmp.eq.s32.totalorder %s32, 1
      %p286 = por %p284, %p285
      %p288 = scmp.ne.s32.totalorder %s273, %s287
      %p289 = scmp.eq.s32.totalorder %s32, 0
      %p290 = por %p288, %p289
      %s292 = sadd.s32 %s291, 1
      %p295 = scmp.eq.s32.totalorder %s26, 1
      %p296 = scmp.ne.s32.totalorder %s291, %s293
      %p297 = scmp.eq.s32.totalorder %s26, 0
      %p298 = por %p296, %p297
      %p299 = scmp.ne.s32.totalorder %s291, %s293
      %p300 = scmp.eq.s32.totalorder %s31, 1
      %p301 = por %p299, %p300
      %p302 = scmp.ne.s32.totalorder %s293, %s294
      %p303 = scmp.eq.s32.totalorder %s31, 0
      %p304 = por %p302, %p303
      %p305 = scmp.ne.s32.totalorder %s293, %s294
      %p306 = scmp.eq.s32.totalorder %s32, 1
      %p307 = por %p305, %p306
      %p309 = scmp.ne.s32.totalorder %s294, %s308
      %p310 = scmp.eq.s32.totalorder %s32, 0
      %p311 = por %p309, %p310
      %s312 = ssub.s32 %s26, %s33
      %p313 = scmp.eq.s32.totalorder %s312, 0
      %s315 = sadd.s32 %s314, 1
      %s316 = scalar_select %p313, %s314, %s315
      %p319 = pneg %p313
      %p320 = scmp.eq.s32.totalorder %s26, 1
      %p321 = por %p319, %p320
      %p322 = scmp.ne.s32.totalorder %s314, %s317
      %p323 = scmp.eq.s32.totalorder %s26, 0
      %p324 = por %p322, %p323
      %p325 = scmp.ne.s32.totalorder %s314, %s317
      %p326 = scmp.eq.s32.totalorder %s31, 1
      %p327 = por %p325, %p326
      %p328 = scmp.ne.s32.totalorder %s317, %s318
      %p329 = scmp.eq.s32.totalorder %s31, 0
      %p330 = por %p328, %p329
      %p331 = scmp.ne.s32.totalorder %s317, %s318
      %p332 = scmp.eq.s32.totalorder %s32, 1
      %p333 = por %p331, %p332
      %p335 = scmp.ne.s32.totalorder %s318, %s334
      %p336 = scmp.eq.s32.totalorder %s32, 0
      %p337 = por %p335, %p336
      %p338 = scmp.le.s32.totalorder 1, %s26
      %p339 = scmp.lt.s32.totalorder %s26, 3
      %p340 = pnand %p338, %p339
      %p341 = pneg %p340
      // Predicated region
      $region9: #{tpu_custom_call.1} parent=5 // pred_check
        _
      $region10: #{tpu_custom_call.1} parent=5 // pred_check_branch
        %343 = sbr.rel (%p340) target = $region12
      $region11: #{tpu_custom_call.1} parent=5 // pred_region
        %s344 = ssub.s32 %s26, 1
        // Predicated region
        $region13: #{tpu_custom_call.1} parent=11 // pred_check
          %p345 = pneg %p73
        $region14: #{tpu_custom_call.1} parent=11 // pred_check_branch
          %347 = sbr.rel (%p345) target = $region16
        $region15: #{tpu_custom_call.1} parent=11 // pred_region
          %349 = vsyncadd [#allocation5], 0
          %s350 = sshll.u32 %s1, 4
          %s351 = int_to_ptr.hbm [resolvable:$true] %s350
          %s352 = sshll.u32 [#allocation4], 4
          %s353 = int_to_ptr.vmem [resolvable:$true] %s352
          %358 = dma.hbm_to_vmem [thread:$0]  %s351, 512, %s353, [#allocation5], 128, 128, 8
        $region16: #{tpu_custom_call.1} parent=11 // pred_fallthru
          _
        // Predicated region
        $region17: #{tpu_custom_call.1} parent=11 // pred_check
          %p359 = pneg %p94
        $region18: #{tpu_custom_call.1} parent=11 // pred_check_branch
          %361 = sbr.rel (%p359) target = $region20
        $region19: #{tpu_custom_call.1} parent=11 // pred_region
          %363 = vsyncadd [#allocation5], 0
          %s365 = sshll.u32 %s2, 4
          %s366 = int_to_ptr.hbm [resolvable:$true] %s365
          %s367 = sshll.u32 [#allocation6], 4
          %s368 = int_to_ptr.vmem [resolvable:$true] %s367
          %370 = dma.hbm_to_vmem [thread:$0]  %s366, 32, %s368, [#allocation5]
        $region20: #{tpu_custom_call.1} parent=11 // pred_fallthru
          _
        // Predicated region
        $region21: #{tpu_custom_call.1} parent=11 // pred_check
          %p371 = pneg %p115
        $region22: #{tpu_custom_call.1} parent=11 // pred_check_branch
          %373 = sbr.rel (%p371) target = $region24
        $region23: #{tpu_custom_call.1} parent=11 // pred_region
          %375 = vsyncadd [#allocation8], 0
          %s376 = sshll.u32 %s3, 4
          %s377 = int_to_ptr.hbm [resolvable:$true] %s376
          %s378 = sshll.u32 [#allocation7], 4
          %s379 = int_to_ptr.vmem [resolvable:$true] %s378
          %384 = dma.hbm_to_vmem [thread:$0]  %s377, 2048, %s379, [#allocation8], 64, 64, 4
        $region24: #{tpu_custom_call.1} parent=11 // pred_fallthru
          _
        // Predicated region
        $region25: #{tpu_custom_call.1} parent=11 // pred_check
          %p385 = pneg %p136
        $region26: #{tpu_custom_call.1} parent=11 // pred_check_branch
          %387 = sbr.rel (%p385) target = $region28
        $region27: #{tpu_custom_call.1} parent=11 // pred_region
          _
        $region28: #{tpu_custom_call.1} parent=11 // pred_fallthru
          _
        // Predicated region
        $region29: #{tpu_custom_call.1} parent=11 // pred_check
          %p388 = pneg %p157
        $region30: #{tpu_custom_call.1} parent=11 // pred_check_branch
          %390 = sbr.rel (%p388) target = $region32
        $region31: #{tpu_custom_call.1} parent=11 // pred_region
          %392 = vsyncadd [#allocation8], 0
          %s393 = sshll.u32 %s5, 4
          %s394 = int_to_ptr.hbm [resolvable:$true] %s393
          %s395 = sshll.u32 [#allocation9], 4
          %s396 = int_to_ptr.vmem [resolvable:$true] %s395
          %401 = dma.hbm_to_vmem [thread:$0]  %s394, 1024, %s396, [#allocation8], 64, 64, 4
        $region32: #{tpu_custom_call.1} parent=11 // pred_fallthru
          _
        // Predicated region
        $region33: #{tpu_custom_call.1} parent=11 // pred_check
          %p402 = pneg %p178
        $region34: #{tpu_custom_call.1} parent=11 // pred_check_branch
          %404 = sbr.rel (%p402) target = $region36
        $region35: #{tpu_custom_call.1} parent=11 // pred_region
          _
        $region36: #{tpu_custom_call.1} parent=11 // pred_fallthru
          _
        // Predicated region
        $region37: #{tpu_custom_call.1} parent=11 // pred_check
          %p405 = pneg %p199
        $region38: #{tpu_custom_call.1} parent=11 // pred_check_branch
          %407 = sbr.rel (%p405) target = $region40
        $region39: #{tpu_custom_call.1} parent=11 // pred_region
          %409 = vsyncadd [#allocation11], 0
          %s410 = sshll.u32 %s7, 4
          %s411 = int_to_ptr.hbm [resolvable:$true] %s410
          %s412 = sshll.u32 [#allocation10], 4
          %s413 = int_to_ptr.vmem [resolvable:$true] %s412
          %418 = dma.hbm_to_vmem [thread:$0]  %s411, 1024, %s413, [#allocation11], 64, 64, 4
        $region40: #{tpu_custom_call.1} parent=11 // pred_fallthru
          _
        // Predicated region
        $region41: #{tpu_custom_call.1} parent=11 // pred_check
          %p419 = pneg %p220
        $region42: #{tpu_custom_call.1} parent=11 // pred_check_branch
          %421 = sbr.rel (%p419) target = $region44
        $region43: #{tpu_custom_call.1} parent=11 // pred_region
          _
        $region44: #{tpu_custom_call.1} parent=11 // pred_fallthru
          _
        // Predicated region
        $region45: #{tpu_custom_call.1} parent=11 // pred_check
          %p422 = pneg %p241
        $region46: #{tpu_custom_call.1} parent=11 // pred_check_branch
          %424 = sbr.rel (%p422) target = $region48
        $region47: #{tpu_custom_call.1} parent=11 // pred_region
          %426 = vsyncadd [#allocation11], 0
          %s427 = sshll.u32 %s9, 4
          %s428 = int_to_ptr.hbm [resolvable:$true] %s427
          %s429 = sshll.u32 [#allocation12], 4
          %s430 = int_to_ptr.vmem [resolvable:$true] %s429
          %435 = dma.hbm_to_vmem [thread:$0]  %s428, 1024, %s430, [#allocation11], 64, 64, 4
        $region48: #{tpu_custom_call.1} parent=11 // pred_fallthru
          _
        // Predicated region
        $region49: #{tpu_custom_call.1} parent=11 // pred_check
          %p436 = pneg %p262
        $region50: #{tpu_custom_call.1} parent=11 // pred_check_branch
          %438 = sbr.rel (%p436) target = $region52
        $region51: #{tpu_custom_call.1} parent=11 // pred_region
          _
        $region52: #{tpu_custom_call.1} parent=11 // pred_fallthru
          _
        // Predicated region
        $region53: #{tpu_custom_call.1} parent=11 // pred_check
          %p439 = pneg %p283
        $region54: #{tpu_custom_call.1} parent=11 // pred_check_branch
          %441 = sbr.rel (%p439) target = $region56
        $region55: #{tpu_custom_call.1} parent=11 // pred_region
          %443 = vsyncadd [#allocation14], 0
          %s444 = sshll.u32 %s11, 4
          %s445 = int_to_ptr.hbm [resolvable:$true] %s444
          %s446 = sshll.u32 [#allocation13], 4
          %s447 = int_to_ptr.vmem [resolvable:$true] %s446
          %452 = dma.hbm_to_vmem [thread:$0]  %s445, 1024, %s447, [#allocation14], 64, 64, 4
        $region56: #{tpu_custom_call.1} parent=11 // pred_fallthru
          _
        // Predicated region
        $region57: #{tpu_custom_call.1} parent=11 // pred_check
          %p453 = pneg %p304
        $region58: #{tpu_custom_call.1} parent=11 // pred_check_branch
          %455 = sbr.rel (%p453) target = $region60
        $region59: #{tpu_custom_call.1} parent=11 // pred_region
          _
        $region60: #{tpu_custom_call.1} parent=11 // pred_fallthru
          _
      $region12: #{tpu_custom_call.1} parent=5 // pred_fallthru
        _
      %p456 = scmp.lt.s32.totalorder %s26, 2
      // Predicated region
      $region61: #{tpu_custom_call.1} parent=5 // pred_check
        %p457 = pneg %p456
      $region62: #{tpu_custom_call.1} parent=5 // pred_check_branch
        %459 = sbr.rel (%p457) target = $region64
      $region63: #{tpu_custom_call.1} parent=5 // pred_region
        // Predicated region
        $region65: #{tpu_custom_call.1} parent=63 // pred_check
          %p460 = pneg %p46
        $region66: #{tpu_custom_call.1} parent=63 // pred_check_branch
          %462 = sbr.rel (%p460) target = $region68
        $region67: #{tpu_custom_call.1} parent=63 // pred_region
          %s463 = sand.u32 %s36, 1
          %s464 = scalar_lea.sflag [#allocation3], %s463
          %s465 = sand.u32 %s36, 1
          %s466 = smul.addr %s465, 8
          %s467 = scalar_lea.vmem [#allocation2], %s466
          %469 = vsyncadd %s464, 0
          %s470 = smul.addr %s26, 8
          %s471 = scalar_lea.hbm %s0, %s470
          %s473 = sshll.u32 %s471, 4
          %s474 = int_to_ptr.hbm [resolvable:$true] %s473
          %s475 = sshll.u32 %s467, 4
          %s476 = int_to_ptr.vmem [resolvable:$true] %s475
          %478 = dma.hbm_to_vmem [thread:$0]  %s474, 128, %s476, %s464
        $region68: #{tpu_custom_call.1} parent=63 // pred_fallthru
          _
      $region64: #{tpu_custom_call.1} parent=5 // pred_fallthru
        _
      %p479 = scmp.le.s32.totalorder 1, %s26
      %p480 = scmp.lt.s32.totalorder %s26, 3
      %p481 = pnand %p479, %p480
      %p482 = pneg %p481
      // Predicated region
      $region69: #{tpu_custom_call.1} parent=5 // pred_check
        _
      $region70: #{tpu_custom_call.1} parent=5 // pred_check_branch
        %484 = sbr.rel (%p481) target = $region72
      $region71: #{tpu_custom_call.1} parent=5 // pred_region
        %s485 = ssub.s32 %s26, 1
        %s486 = sand.u32 %s39, 1
        %s487 = scalar_lea.sflag [#allocation3], %s486
        %s488 = sand.u32 %s39, 1
        %s489 = smul.addr %s488, 8
        %s490 = scalar_lea.vmem [#allocation2], %s489
        // Predicated region
        $region73: #{tpu_custom_call.1} parent=71 // pred_check
          %p491 = pneg %p52
        $region74: #{tpu_custom_call.1} parent=71 // pred_check_branch
          %493 = sbr.rel (%p491) target = $region76
        $region75: #{tpu_custom_call.1} parent=71 // pred_region
          %495 = dma.done %s487, 128
        $region76: #{tpu_custom_call.1} parent=71 // pred_fallthru
          _
        // Predicated region
        $region77: #{tpu_custom_call.1} parent=71 // pred_check
          %p496 = pneg %p73
        $region78: #{tpu_custom_call.1} parent=71 // pred_check_branch
          %498 = sbr.rel (%p496) target = $region80
        $region79: #{tpu_custom_call.1} parent=71 // pred_region
          %500 = dma.done [#allocation5], 512
        $region80: #{tpu_custom_call.1} parent=71 // pred_fallthru
          _
        // Predicated region
        $region81: #{tpu_custom_call.1} parent=71 // pred_check
          %p501 = pneg %p94
        $region82: #{tpu_custom_call.1} parent=71 // pred_check_branch
          %503 = sbr.rel (%p501) target = $region84
        $region83: #{tpu_custom_call.1} parent=71 // pred_region
          %505 = dma.done [#allocation5], 32
        $region84: #{tpu_custom_call.1} parent=71 // pred_fallthru
          _
        // Predicated region
        $region85: #{tpu_custom_call.1} parent=71 // pred_check
          %p506 = pneg %p115
        $region86: #{tpu_custom_call.1} parent=71 // pred_check_branch
          %508 = sbr.rel (%p506) target = $region88
        $region87: #{tpu_custom_call.1} parent=71 // pred_region
          %510 = dma.done [#allocation8], 2048
        $region88: #{tpu_custom_call.1} parent=71 // pred_fallthru
          _
        // Predicated region
        $region89: #{tpu_custom_call.1} parent=71 // pred_check
          %p511 = pneg %p157
        $region90: #{tpu_custom_call.1} parent=71 // pred_check_branch
          %513 = sbr.rel (%p511) target = $region92
        $region91: #{tpu_custom_call.1} parent=71 // pred_region
          %515 = dma.done [#allocation8], 1024
        $region92: #{tpu_custom_call.1} parent=71 // pred_fallthru
          _
        // Predicated region
        $region93: #{tpu_custom_call.1} parent=71 // pred_check
          %p516 = pneg %p199
        $region94: #{tpu_custom_call.1} parent=71 // pred_check_branch
          %518 = sbr.rel (%p516) target = $region96
        $region95: #{tpu_custom_call.1} parent=71 // pred_region
          %520 = dma.done [#allocation11], 1024
        $region96: #{tpu_custom_call.1} parent=71 // pred_fallthru
          _
        // Predicated region
        $region97: #{tpu_custom_call.1} parent=71 // pred_check
          %p521 = pneg %p241
        $region98: #{tpu_custom_call.1} parent=71 // pred_check_branch
          %523 = sbr.rel (%p521) target = $region100
        $region99: #{tpu_custom_call.1} parent=71 // pred_region
          %525 = dma.done [#allocation11], 1024
        $region100: #{tpu_custom_call.1} parent=71 // pred_fallthru
          _
        // Predicated region
        $region101: #{tpu_custom_call.1} parent=71 // pred_check
          %p526 = pneg %p283
        $region102: #{tpu_custom_call.1} parent=71 // pred_check_branch
          %528 = sbr.rel (%p526) target = $region104
        $region103: #{tpu_custom_call.1} parent=71 // pred_region
          %530 = dma.done [#allocation14], 1024
        $region104: #{tpu_custom_call.1} parent=71 // pred_fallthru
          _
        %s531 = sand.u32 %s39, 1
        %s532 = scalar_lea.sflag [#allocation3], %s531
        %s533 = sand.u32 %s39, 1
        %s534 = smul.addr %s533, 8
        %s535 = scalar_lea.vmem [#allocation2], %s534
        %p536 = pneg %p52
        %p537 = pneg %p49
        %p538 = pneg %p73
        %p539 = pneg %p70
        %p540 = pneg %p94
        %p541 = pneg %p91
        %p542 = pneg %p115
        %p543 = pneg %p112
        %p544 = pneg %p136
        %p545 = pneg %p133
        %p546 = pneg %p157
        %p547 = pneg %p154
        %p548 = pneg %p178
        %p549 = pneg %p175
        %p550 = pneg %p199
        %p551 = pneg %p196
        %p552 = pneg %p220
        %p553 = pneg %p217
        %p554 = pneg %p241
        %p555 = pneg %p238
        %p556 = pneg %p262
        %p557 = pneg %p259
        %p558 = pneg %p283
        %p559 = pneg %p280
        %p560 = pneg %p304
        %p561 = pneg %p301
        %p562 = pneg %p330
        %p563 = pneg %p327
        %p564 = scmp.lt.s32.totalorder %s31, 1
        %s565 = scalar_select %p564, %s31, 1
        %s566 = smul.addr %s565, 8
        %s567 = scalar_lea.vmem %s13, %s566
        %p568 = scmp.lt.s32.totalorder %s31, 1
        %s569 = scalar_select %p568, %s31, 1
        %s570 = smul.addr %s569, 8
        %s571 = scalar_lea.vmem %s13, %s570
        %v573 = vld [vmem:[%s490] sm:$0xff]
        %v574 = vpack.c.bf16 %v573, %v573
        %v575 = vld [vmem:[#allocation4] sm:$0xff]
        %v576 = vld [vmem:[#allocation4 + $0x8] sm:$0xff]
        %v577 = vld [vmem:[#allocation4 + $0x10] sm:$0xff]
        %v578 = vld [vmem:[#allocation4 + $0x18] sm:$0xff]
        %v579 = vld [vmem:[#allocation6] sm:$0x3]
        %v581 = vperm.slane %v579, 0
        %v582 = vperm.slane %v579, 1
        %v589 = vunpack.c.l.b16 %v575
        %v590 = vunpack.c.h.b16 %v575
        %v591 = vunpack.c.l.b16 %v576
        %v592 = vunpack.c.h.b16 %v576
        %v593 = vunpack.c.l.b16 %v577
        %v594 = vunpack.c.h.b16 %v577
        %v595 = vunpack.c.l.b16 %v578
        %v596 = vunpack.c.h.b16 %v578
        %v597 = vpack.c.b16 %v591, %v589
        %v598 = vpack.c.b16 %v592, %v590
        %v599 = vpack.c.b16 %v595, %v593
        %v600 = vpack.c.b16 %v596, %v594
        %vm605 = vcmask 261120
        %v607 = vsel %vm605, %v574, 0
        %609 = vmatpush.bf16.msra.mxu0 0
        %610 = vmatpush.bf16.msra.mxu0 0
        %611 = vmatpush.bf16.msra.mxu0 0
        %612 = vmatpush.bf16.msra.mxu0 0
        %613 = vmatpush.bf16.msra.mxu0 0
        %614 = vmatpush.bf16.msra.mxu0 0
        %615 = vmatpush.bf16.msra.mxu0 %v599
        %616 = vmatpush.bf16.msra.mxu0 %v597
        %617 = vmatmul.bf16.gmra.mxu0 %v607
        %v618 = vpop.f32.mrf.mxu0
        %v619 = vadd.f32 %v581, %v618
        %v620 = vpop.f32.mrf.mxu0
        %621 = vdwg.mxu0
        %622 = vmatpush.bf16.msra.mxu0 0
        %623 = vmatpush.bf16.msra.mxu0 0
        %624 = vmatpush.bf16.msra.mxu0 0
        %625 = vmatpush.bf16.msra.mxu0 0
        %626 = vmatpush.bf16.msra.mxu0 0
        %627 = vmatpush.bf16.msra.mxu0 0
        %628 = vmatpush.bf16.msra.mxu0 %v600
        %629 = vmatpush.bf16.msra.mxu0 %v598
        %630 = vmatmul.bf16.gmra.mxu0 %v607
        %v631 = vpop.f32.mrf.mxu0
        %v632 = vadd.f32 %v582, %v631
        %v633 = vpop.f32.mrf.mxu0
        %634 = vdwg.mxu0
        %v635 = vmax.f32 %v619, 0.0
        %v636 = vmax.f32 %v632, 0.0
        %v637 = vpack.c.bf16 %v635, %v635
        %v638 = vpack.c.bf16 %v636, %v636
        %v639 = vld [vmem:[#allocation7] sm:$0xf]
        %v640 = vld [vmem:[#allocation7 + $0x4] sm:$0xf]
        %v641 = vld [vmem:[#allocation7 + $0x8] sm:$0xf]
        %v642 = vld [vmem:[#allocation7 + $0xc] sm:$0xf]
        %v643 = vld [vmem:[#allocation7 + $0x10] sm:$0xf]
        %v644 = vld [vmem:[#allocation7 + $0x14] sm:$0xf]
        %v645 = vld [vmem:[#allocation7 + $0x18] sm:$0xf]
        %v646 = vld [vmem:[#allocation7 + $0x1c] sm:$0xf]
        %v647 = vld [vmem:[#allocation7 + $0x20] sm:$0xf]
        %v648 = vld [vmem:[#allocation7 + $0x24] sm:$0xf]
        %v649 = vld [vmem:[#allocation7 + $0x28] sm:$0xf]
        %v650 = vld [vmem:[#allocation7 + $0x2c] sm:$0xf]
        %v651 = vld [vmem:[#allocation7 + $0x30] sm:$0xf]
        %v652 = vld [vmem:[#allocation7 + $0x34] sm:$0xf]
        %v653 = vld [vmem:[#allocation7 + $0x38] sm:$0xf]
        %v654 = vld [vmem:[#allocation7 + $0x3c] sm:$0xf]
        %v655 = vld [vmem:[#allocation7 + $0x40] sm:$0xf]
        %v656 = vld [vmem:[#allocation7 + $0x44] sm:$0xf]
        %v657 = vld [vmem:[#allocation7 + $0x48] sm:$0xf]
        %v658 = vld [vmem:[#allocation7 + $0x4c] sm:$0xf]
        %v659 = vld [vmem:[#allocation7 + $0x50] sm:$0xf]
        %v660 = vld [vmem:[#allocation7 + $0x54] sm:$0xf]
        %v661 = vld [vmem:[#allocation7 + $0x58] sm:$0xf]
        %v662 = vld [vmem:[#allocation7 + $0x5c] sm:$0xf]
        %v663 = vld [vmem:[#allocation7 + $0x60] sm:$0xf]
        %v664 = vld [vmem:[#allocation7 + $0x64] sm:$0xf]
        %v665 = vld [vmem:[#allocation7 + $0x68] sm:$0xf]
        %v666 = vld [vmem:[#allocation7 + $0x6c] sm:$0xf]
        %v667 = vld [vmem:[#allocation7 + $0x70] sm:$0xf]
        %v668 = vld [vmem:[#allocation7 + $0x74] sm:$0xf]
        %v669 = vld [vmem:[#allocation7 + $0x78] sm:$0xf]
        %v670 = vld [vmem:[#allocation7 + $0x7c] sm:$0xf]
        %v671 = vld [vmem:[%s4] sm:$0x1]
        %v673 = vperm.slane %v671, 0
        %v707 = vunpack.c.l.b16 %v639
        %v708 = vunpack.c.l.b16 %v640
        %v709 = vunpack.c.l.b16 %v641
        %v710 = vunpack.c.l.b16 %v642
        %v711 = vunpack.c.l.b16 %v643
        %v712 = vunpack.c.l.b16 %v644
        %v713 = vunpack.c.l.b16 %v645
        %v714 = vunpack.c.l.b16 %v646
        %v715 = vunpack.c.l.b16 %v647
        %v716 = vunpack.c.l.b16 %v648
        %v717 = vunpack.c.l.b16 %v649
        %v718 = vunpack.c.l.b16 %v650
        %v719 = vunpack.c.l.b16 %v651
        %v720 = vunpack.c.l.b16 %v652
        %v721 = vunpack.c.l.b16 %v653
        %v722 = vunpack.c.l.b16 %v654
        %v723 = vunpack.c.l.b16 %v655
        %v724 = vunpack.c.l.b16 %v656
        %v725 = vunpack.c.l.b16 %v657
        %v726 = vunpack.c.l.b16 %v658
        %v727 = vunpack.c.l.b16 %v659
        %v728 = vunpack.c.l.b16 %v660
        %v729 = vunpack.c.l.b16 %v661
        %v730 = vunpack.c.l.b16 %v662
        %v731 = vunpack.c.l.b16 %v663
        %v732 = vunpack.c.l.b16 %v664
        %v733 = vunpack.c.l.b16 %v665
        %v734 = vunpack.c.l.b16 %v666
        %v735 = vunpack.c.l.b16 %v667
        %v736 = vunpack.c.l.b16 %v668
        %v737 = vunpack.c.l.b16 %v669
        %v738 = vunpack.c.l.b16 %v670
        %v739 = vpack.c.b16 %v708, %v707
        %v740 = vpack.c.b16 %v710, %v709
        %v741 = vpack.c.b16 %v712, %v711
        %v742 = vpack.c.b16 %v714, %v713
        %v743 = vpack.c.b16 %v716, %v715
        %v744 = vpack.c.b16 %v718, %v717
        %v745 = vpack.c.b16 %v720, %v719
        %v746 = vpack.c.b16 %v722, %v721
        %v747 = vpack.c.b16 %v724, %v723
        %v748 = vpack.c.b16 %v726, %v725
        %v749 = vpack.c.b16 %v728, %v727
        %v750 = vpack.c.b16 %v730, %v729
        %v751 = vpack.c.b16 %v732, %v731
        %v752 = vpack.c.b16 %v734, %v733
        %v753 = vpack.c.b16 %v736, %v735
        %v754 = vpack.c.b16 %v738, %v737
        %771 = vmatpush.bf16.msra.mxu0 %v746
        %772 = vmatpush.bf16.msra.mxu0 %v745
        %773 = vmatpush.bf16.msra.mxu0 %v744
        %774 = vmatpush.bf16.msra.mxu0 %v743
        %775 = vmatpush.bf16.msra.mxu0 %v742
        %776 = vmatpush.bf16.msra.mxu0 %v741
        %777 = vmatpush.bf16.msra.mxu0 %v740
        %778 = vmatpush.bf16.msra.mxu0 %v739
        %779 = vmatmul.bf16.gmra.mxu0 %v637
        %v780 = vpop.f32.mrf.mxu0
        %v781 = vadd.f32 %v673, %v780
        %v782 = vpop.f32.mrf.mxu0
        %783 = vdwg.mxu0
        %784 = vmatpush.bf16.msra.mxu0 %v754
        %785 = vmatpush.bf16.msra.mxu0 %v753
        %786 = vmatpush.bf16.msra.mxu0 %v752
        %787 = vmatpush.bf16.msra.mxu0 %v751
        %788 = vmatpush.bf16.msra.mxu0 %v750
        %789 = vmatpush.bf16.msra.mxu0 %v749
        %790 = vmatpush.bf16.msra.mxu0 %v748
        %791 = vmatpush.bf16.msra.mxu0 %v747
        %792 = vmatmul.bf16.gmra.mxu0 %v638
        %v793 = vpop.f32.mrf.mxu0
        %v794 = vadd.f32 %v781, %v793
        %v795 = vpop.f32.mrf.mxu0
        %796 = vdwg.mxu0
        %v797 = vmax.f32 %v794, 0.0
        %v798 = vpack.c.bf16 %v797, %v797
        %v799 = vld [vmem:[#allocation9] sm:$0xf]
        %v800 = vld [vmem:[#allocation9 + $0x4] sm:$0xf]
        %v801 = vld [vmem:[#allocation9 + $0x8] sm:$0xf]
        %v802 = vld [vmem:[#allocation9 + $0xc] sm:$0xf]
        %v803 = vld [vmem:[#allocation9 + $0x10] sm:$0xf]
        %v804 = vld [vmem:[#allocation9 + $0x14] sm:$0xf]
        %v805 = vld [vmem:[#allocation9 + $0x18] sm:$0xf]
        %v806 = vld [vmem:[#allocation9 + $0x1c] sm:$0xf]
        %v807 = vld [vmem:[#allocation9 + $0x20] sm:$0xf]
        %v808 = vld [vmem:[#allocation9 + $0x24] sm:$0xf]
        %v809 = vld [vmem:[#allocation9 + $0x28] sm:$0xf]
        %v810 = vld [vmem:[#allocation9 + $0x2c] sm:$0xf]
        %v811 = vld [vmem:[#allocation9 + $0x30] sm:$0xf]
        %v812 = vld [vmem:[#allocation9 + $0x34] sm:$0xf]
        %v813 = vld [vmem:[#allocation9 + $0x38] sm:$0xf]
        %v814 = vld [vmem:[#allocation9 + $0x3c] sm:$0xf]
        %v815 = vld [vmem:[%s6] sm:$0x1]
        %v817 = vperm.slane %v815, 0
        %v835 = vunpack.c.l.b16 %v799
        %v836 = vunpack.c.l.b16 %v800
        %v837 = vunpack.c.l.b16 %v801
        %v838 = vunpack.c.l.b16 %v802
        %v839 = vunpack.c.l.b16 %v803
        %v840 = vunpack.c.l.b16 %v804
        %v841 = vunpack.c.l.b16 %v805
        %v842 = vunpack.c.l.b16 %v806
        %v843 = vunpack.c.l.b16 %v807
        %v844 = vunpack.c.l.b16 %v808
        %v845 = vunpack.c.l.b16 %v809
        %v846 = vunpack.c.l.b16 %v810
        %v847 = vunpack.c.l.b16 %v811
        %v848 = vunpack.c.l.b16 %v812
        %v849 = vunpack.c.l.b16 %v813
        %v850 = vunpack.c.l.b16 %v814
        %v851 = vpack.c.b16 %v836, %v835
        %v852 = vpack.c.b16 %v838, %v837
        %v853 = vpack.c.b16 %v840, %v839
        %v854 = vpack.c.b16 %v842, %v841
        %v855 = vpack.c.b16 %v844, %v843
        %v856 = vpack.c.b16 %v846, %v845
        %v857 = vpack.c.b16 %v848, %v847
        %v858 = vpack.c.b16 %v850, %v849
        %867 = vmatpush.bf16.msra.mxu0 %v858
        %868 = vmatpush.bf16.msra.mxu0 %v857
        %869 = vmatpush.bf16.msra.mxu0 %v856
        %870 = vmatpush.bf16.msra.mxu0 %v855
        %871 = vmatpush.bf16.msra.mxu0 %v854
        %872 = vmatpush.bf16.msra.mxu0 %v853
        %873 = vmatpush.bf16.msra.mxu0 %v852
        %874 = vmatpush.bf16.msra.mxu0 %v851
        %875 = vmatmul.bf16.gmra.mxu0 %v798
        %v876 = vpop.f32.mrf.mxu0
        %v877 = vadd.f32 %v817, %v876
        %v878 = vpop.f32.mrf.mxu0
        %879 = vdwg.mxu0
        %v880 = vmax.f32 %v877, 0.0
        %v881 = vpack.c.bf16 %v880, %v880
        %v882 = vld [vmem:[#allocation10] sm:$0xf]
        %v883 = vld [vmem:[#allocation10 + $0x4] sm:$0xf]
        %v884 = vld [vmem:[#allocation10 + $0x8] sm:$0xf]
        %v885 = vld [vmem:[#allocation10 + $0xc] sm:$0xf]
        %v886 = vld [vmem:[#allocation10 + $0x10] sm:$0xf]
        %v887 = vld [vmem:[#allocation10 + $0x14] sm:$0xf]
        %v888 = vld [vmem:[#allocation10 + $0x18] sm:$0xf]
        %v889 = vld [vmem:[#allocation10 + $0x1c] sm:$0xf]
        %v890 = vld [vmem:[#allocation10 + $0x20] sm:$0xf]
        %v891 = vld [vmem:[#allocation10 + $0x24] sm:$0xf]
        %v892 = vld [vmem:[#allocation10 + $0x28] sm:$0xf]
        %v893 = vld [vmem:[#allocation10 + $0x2c] sm:$0xf]
        %v894 = vld [vmem:[#allocation10 + $0x30] sm:$0xf]
        %v895 = vld [vmem:[#allocation10 + $0x34] sm:$0xf]
        %v896 = vld [vmem:[#allocation10 + $0x38] sm:$0xf]
        %v897 = vld [vmem:[#allocation10 + $0x3c] sm:$0xf]
        %v898 = vld [vmem:[%s8] sm:$0x1]
        %v900 = vperm.slane %v898, 0
        %v918 = vunpack.c.l.b16 %v882
        %v919 = vunpack.c.l.b16 %v883
        %v920 = vunpack.c.l.b16 %v884
        %v921 = vunpack.c.l.b16 %v885
        %v922 = vunpack.c.l.b16 %v886
        %v923 = vunpack.c.l.b16 %v887
        %v924 = vunpack.c.l.b16 %v888
        %v925 = vunpack.c.l.b16 %v889
        %v926 = vunpack.c.l.b16 %v890
        %v927 = vunpack.c.l.b16 %v891
        %v928 = vunpack.c.l.b16 %v892
        %v929 = vunpack.c.l.b16 %v893
        %v930 = vunpack.c.l.b16 %v894
        %v931 = vunpack.c.l.b16 %v895
        %v932 = vunpack.c.l.b16 %v896
        %v933 = vunpack.c.l.b16 %v897
        %v934 = vpack.c.b16 %v919, %v918
        %v935 = vpack.c.b16 %v921, %v920
        %v936 = vpack.c.b16 %v923, %v922
        %v937 = vpack.c.b16 %v925, %v924
        %v938 = vpack.c.b16 %v927, %v926
        %v939 = vpack.c.b16 %v929, %v928
        %v940 = vpack.c.b16 %v931, %v930
        %v941 = vpack.c.b16 %v933, %v932
        %950 = vmatpush.bf16.msra.mxu0 %v941
        %951 = vmatpush.bf16.msra.mxu0 %v940
        %952 = vmatpush.bf16.msra.mxu0 %v939
        %953 = vmatpush.bf16.msra.mxu0 %v938
        %954 = vmatpush.bf16.msra.mxu0 %v937
        %955 = vmatpush.bf16.msra.mxu0 %v936
        %956 = vmatpush.bf16.msra.mxu0 %v935
        %957 = vmatpush.bf16.msra.mxu0 %v934
        %958 = vmatmul.bf16.gmra.mxu0 %v881
        %v959 = vpop.f32.mrf.mxu0
        %v960 = vadd.f32 %v900, %v959
        %v961 = vpop.f32.mrf.mxu0
        %962 = vdwg.mxu0
        %v963 = vmax.f32 %v960, 0.0
        %v964 = vpack.c.bf16 %v963, %v963
        %v965 = vld [vmem:[#allocation12] sm:$0xf]
        %v966 = vld [vmem:[#allocation12 + $0x4] sm:$0xf]
        %v967 = vld [vmem:[#allocation12 + $0x8] sm:$0xf]
        %v968 = vld [vmem:[#allocation12 + $0xc] sm:$0xf]
        %v969 = vld [vmem:[#allocation12 + $0x10] sm:$0xf]
        %v970 = vld [vmem:[#allocation12 + $0x14] sm:$0xf]
        %v971 = vld [vmem:[#allocation12 + $0x18] sm:$0xf]
        %v972 = vld [vmem:[#allocation12 + $0x1c] sm:$0xf]
        %v973 = vld [vmem:[#allocation12 + $0x20] sm:$0xf]
        %v974 = vld [vmem:[#allocation12 + $0x24] sm:$0xf]
        %v975 = vld [vmem:[#allocation12 + $0x28] sm:$0xf]
        %v976 = vld [vmem:[#allocation12 + $0x2c] sm:$0xf]
        %v977 = vld [vmem:[#allocation12 + $0x30] sm:$0xf]
        %v978 = vld [vmem:[#allocation12 + $0x34] sm:$0xf]
        %v979 = vld [vmem:[#allocation12 + $0x38] sm:$0xf]
        %v980 = vld [vmem:[#allocation12 + $0x3c] sm:$0xf]
        %v981 = vld [vmem:[%s10] sm:$0x1]
        %v983 = vperm.slane %v981, 0
        %v1001 = vunpack.c.l.b16 %v965
        %v1002 = vunpack.c.l.b16 %v966
        %v1003 = vunpack.c.l.b16 %v967
        %v1004 = vunpack.c.l.b16 %v968
        %v1005 = vunpack.c.l.b16 %v969
        %v1006 = vunpack.c.l.b16 %v970
        %v1007 = vunpack.c.l.b16 %v971
        %v1008 = vunpack.c.l.b16 %v972
        %v1009 = vunpack.c.l.b16 %v973
        %v1010 = vunpack.c.l.b16 %v974
        %v1011 = vunpack.c.l.b16 %v975
        %v1012 = vunpack.c.l.b16 %v976
        %v1013 = vunpack.c.l.b16 %v977
        %v1014 = vunpack.c.l.b16 %v978
        %v1015 = vunpack.c.l.b16 %v979
        %v1016 = vunpack.c.l.b16 %v980
        %v1017 = vpack.c.b16 %v1002, %v1001
        %v1018 = vpack.c.b16 %v1004, %v1003
        %v1019 = vpack.c.b16 %v1006, %v1005
        %v1020 = vpack.c.b16 %v1008, %v1007
        %v1021 = vpack.c.b16 %v1010, %v1009
        %v1022 = vpack.c.b16 %v1012, %v1011
        %v1023 = vpack.c.b16 %v1014, %v1013
        %v1024 = vpack.c.b16 %v1016, %v1015
        %1033 = vmatpush.bf16.msra.mxu0 %v1024
        %1034 = vmatpush.bf16.msra.mxu0 %v1023
        %1035 = vmatpush.bf16.msra.mxu0 %v1022
        %1036 = vmatpush.bf16.msra.mxu0 %v1021
        %1037 = vmatpush.bf16.msra.mxu0 %v1020
        %1038 = vmatpush.bf16.msra.mxu0 %v1019
        %1039 = vmatpush.bf16.msra.mxu0 %v1018
        %1040 = vmatpush.bf16.msra.mxu0 %v1017
        %1041 = vmatmul.bf16.gmra.mxu0 %v964
        %v1042 = vpop.f32.mrf.mxu0
        %v1043 = vadd.f32 %v983, %v1042
        %v1044 = vpop.f32.mrf.mxu0
        %1045 = vdwg.mxu0
        %v1046 = vmax.f32 %v1043, 0.0
        %v1047 = vpack.c.bf16 %v1046, %v1046
        %v1048 = vld [vmem:[#allocation13] sm:$0xf]
        %v1049 = vld [vmem:[#allocation13 + $0x4] sm:$0xf]
        %v1050 = vld [vmem:[#allocation13 + $0x8] sm:$0xf]
        %v1051 = vld [vmem:[#allocation13 + $0xc] sm:$0xf]
        %v1052 = vld [vmem:[#allocation13 + $0x10] sm:$0xf]
        %v1053 = vld [vmem:[#allocation13 + $0x14] sm:$0xf]
        %v1054 = vld [vmem:[#allocation13 + $0x18] sm:$0xf]
        %v1055 = vld [vmem:[#allocation13 + $0x1c] sm:$0xf]
        %v1056 = vld [vmem:[#allocation13 + $0x20] sm:$0xf]
        %v1057 = vld [vmem:[#allocation13 + $0x24] sm:$0xf]
        %v1058 = vld [vmem:[#allocation13 + $0x28] sm:$0xf]
        %v1059 = vld [vmem:[#allocation13 + $0x2c] sm:$0xf]
        %v1060 = vld [vmem:[#allocation13 + $0x30] sm:$0xf]
        %v1061 = vld [vmem:[#allocation13 + $0x34] sm:$0xf]
        %v1062 = vld [vmem:[#allocation13 + $0x38] sm:$0xf]
        %v1063 = vld [vmem:[#allocation13 + $0x3c] sm:$0xf]
        %v1064 = vld [vmem:[%s12] sm:$0x1]
        %v1066 = vperm.slane %v1064, 0
        %v1084 = vunpack.c.l.b16 %v1048
        %v1085 = vunpack.c.l.b16 %v1049
        %v1086 = vunpack.c.l.b16 %v1050
        %v1087 = vunpack.c.l.b16 %v1051
        %v1088 = vunpack.c.l.b16 %v1052
        %v1089 = vunpack.c.l.b16 %v1053
        %v1090 = vunpack.c.l.b16 %v1054
        %v1091 = vunpack.c.l.b16 %v1055
        %v1092 = vunpack.c.l.b16 %v1056
        %v1093 = vunpack.c.l.b16 %v1057
        %v1094 = vunpack.c.l.b16 %v1058
        %v1095 = vunpack.c.l.b16 %v1059
        %v1096 = vunpack.c.l.b16 %v1060
        %v1097 = vunpack.c.l.b16 %v1061
        %v1098 = vunpack.c.l.b16 %v1062
        %v1099 = vunpack.c.l.b16 %v1063
        %v1100 = vpack.c.b16 %v1085, %v1084
        %v1101 = vpack.c.b16 %v1087, %v1086
        %v1102 = vpack.c.b16 %v1089, %v1088
        %v1103 = vpack.c.b16 %v1091, %v1090
        %v1104 = vpack.c.b16 %v1093, %v1092
        %v1105 = vpack.c.b16 %v1095, %v1094
        %v1106 = vpack.c.b16 %v1097, %v1096
        %v1107 = vpack.c.b16 %v1099, %v1098
        %1116 = vmatpush.bf16.msra.mxu0 %v1107
        %1117 = vmatpush.bf16.msra.mxu0 %v1106
        %1118 = vmatpush.bf16.msra.mxu0 %v1105
        %1119 = vmatpush.bf16.msra.mxu0 %v1104
        %1120 = vmatpush.bf16.msra.mxu0 %v1103
        %1121 = vmatpush.bf16.msra.mxu0 %v1102
        %1122 = vmatpush.bf16.msra.mxu0 %v1101
        %1123 = vmatpush.bf16.msra.mxu0 %v1100
        %1124 = vmatmul.bf16.gmra.mxu0 %v1047
        %v1125 = vpop.f32.mrf.mxu0
        %v1126 = vadd.f32 %v1066, %v1125
        %v1127 = vpop.f32.mrf.mxu0
        %1128 = vdwg.mxu0
        %v1129 = vmax.f32 %v1126, 0.0
        %vm1130 = vcmask 7168
        %1131 = vst.msk [vmem:[%s571] sm:$0xff] %vm1130, %v1129
        %p1132 = scmp.lt.s32.totalorder %s31, 1
        %s1133 = scalar_select %p1132, %s31, 1
        %s1134 = smul.addr %s1133, 8
        %s1135 = scalar_lea.vmem %s13, %s1134
        // Predicated region
        $region105: #{tpu_custom_call.1} parent=71 // pred_check
          %p1136 = pneg %p327
        $region106: #{tpu_custom_call.1} parent=71 // pred_check_branch
          %1138 = sbr.rel (%p1136) target = $region108
        $region107: #{tpu_custom_call.1} parent=71 // pred_region
          _
        $region108: #{tpu_custom_call.1} parent=71 // pred_fallthru
          _
      $region72: #{tpu_custom_call.1} parent=5 // pred_fallthru
        _
      %p1139 = scmp.le.s32.totalorder 2, %s26
      // Predicated region
      $region109: #{tpu_custom_call.1} parent=5 // pred_check
        %p1140 = pneg %p1139
      $region110: #{tpu_custom_call.1} parent=5 // pred_check_branch
        %1142 = sbr.rel (%p1140) target = $region112
      $region111: #{tpu_custom_call.1} parent=5 // pred_region
        %s1143 = ssub.s32 %s26, 2
        // Predicated region
        $region113: #{tpu_custom_call.1} parent=111 // pred_check
          %p1144 = pneg %p333
        $region114: #{tpu_custom_call.1} parent=111 // pred_check_branch
          %1146 = sbr.rel (%p1144) target = $region116
        $region115: #{tpu_custom_call.1} parent=111 // pred_region
          %p1147 = scmp.lt.s32.totalorder %s32, 1
          %s1148 = scalar_select %p1147, %s32, 1
          %s1149 = smul.addr %s1148, 8
          %s1150 = scalar_lea.vmem %s13, %s1149
        $region116: #{tpu_custom_call.1} parent=111 // pred_fallthru
          _
      $region112: #{tpu_custom_call.1} parent=5 // pred_fallthru
        _
    $region6: #{tpu_custom_call.1} parent=1 // loop_footer
      %s30 = sadd.s32 1, %s26
    $region7: #{tpu_custom_call.1} parent=1 // loop_footer_branch
      %25 = sbr.rel target = $region3
    $region8: #{tpu_custom_call.1} parent=1 // loop_exit
      _
    %1151 = vsyncpa [#allocation3], 1
    %s1152 = scalar_lea.sflag [#allocation3], 1
    %1153 = vsyncpa %s1152, 1
    %1154 = vsyncpa [#allocation5], 1
    %1155 = vsyncpa [#allocation8], 1
    %1156 = vsyncpa [#allocation11], 1
    %1157 = vsyncpa [#allocation14], 1

</llo_original>
